<compile_context>
chip_gen: v7x
topology: tpu7x:2x2x1
jax: 0.10.0
libtpu: 0.0.40
codegen_flags: <defaults>
</compile_context>

<pallas_src>
import functools

import jax
import jax.numpy as jnp
from jax.experimental import pallas as pl
from jax.experimental.pallas import tpu as pltpu

# ---- module hyper-parameters (from __init__) --------------------------------
INPUT_SIZE = 32        # len(cols) is not given; pick a small deterministic value
HIDDEN_SIZE = 2048
OUTPUT_SIZE = 1
NUM_LAYERS = 2         # <= 2  => fc1 / dropout / relu / fc2 path
DROPOUT_RATE = 0.25    # unused at inference (identity)

K_AUG = INPUT_SIZE + 1          # +1 ones-column for the folded bias
K_PAD = 40                      # zero-pad K for friendlier bf16 sublane packing
H_CHUNK = 512                   # hidden-dim chunk processed per inner step
LANES = 128


def _mlp_kernel(x_ref, w1_ref, w2_ref, b2_ref, o_ref):
    tb = x_ref.shape[0]
    xa = x_ref[...].astype(jnp.bfloat16)               # [TB, K_PAD] bf16
    acc = jnp.zeros((tb, LANES), jnp.float32)          # per-lane-group partials

    # Chunk the hidden dim so the f32 intermediate stays [TB, H_CHUNK].
    for c in range(HIDDEN_SIZE // H_CHUNK):
        lo = c * H_CHUNK
        w1c = w1_ref[:, lo:lo + H_CHUNK]               # [K_PAD, HC] bf16 (b1 folded in)
        hc = jnp.dot(xa, w1c,
                     preferred_element_type=jnp.float32)   # fc1 (+b1) on the MXU
        # dropout (eval mode) -> identity
        hc = jnp.maximum(hc, 0.0)                      # relu on the VPU
        pc = hc * w2_ref[:, lo:lo + H_CHUNK]           # fc2 weight multiply (VPU, f32)
        # Accumulate 128-lane groups with pure VPU adds (no per-chunk XLU reduce).
        for j in range(H_CHUNK // LANES):
            acc = acc + pc[:, j * LANES:(j + 1) * LANES]

    y = jnp.sum(acc, axis=-1, keepdims=True)           # single 128-wide XLU reduce
    o_ref[...] = (y + b2_ref[...]).astype(o_ref.dtype)


def _round_up(x, m):
    return ((x + m - 1) // m) * m


def _pick_tb(batch):
    """Batch-tile size: big tiles amortize the ~0.35 us/step overhead; for
    moderate/large batches keep >= 2 tiles so v7x megacore can shard."""
    if batch < 128:
        return batch                                    # single tiny tile
    tb = _round_up(pl.cdiv(batch, 2), 8)                # >= 2 tiles
    return min(2048, tb)                                # VMEM cap (v7x 64 MiB/TC)


def prepare_params(w1, b1, w2_row, b2):
    """One-time weight packing.
    w1: [INPUT, HIDDEN] f32, b1: [1, HIDDEN] f32, w2_row: [1, HIDDEN] f32,
    b2: [1, OUTPUT] f32.  Returns (w1_aug_bf16 [K_PAD, HIDDEN], w2_row, b2)."""
    zeros = jnp.zeros((K_PAD - K_AUG, HIDDEN_SIZE), jnp.float32)
    w1_aug = jnp.concatenate([w1, b1, zeros], axis=0)   # bias as extra row
    return w1_aug.astype(jnp.bfloat16), w2_row, b2


def _augment_x(x):
    b = x.shape[0]
    ones = jnp.ones((b, 1), x.dtype)                    # multiplies the b1 row
    zeros = jnp.zeros((b, K_PAD - K_AUG), x.dtype)      # multiplies the zero rows
    return jnp.concatenate([x, ones, zeros], axis=1)


@functools.partial(jax.jit, static_argnames=())
def linear_net_forward(x, w1_aug_bf16, w2_row, b2):
    """x: [B, INPUT_SIZE]; w1_aug_bf16: [K_PAD, HIDDEN] bf16 (b1 folded);
    w2_row: [1, HIDDEN] f32; b2: [1, OUTPUT] f32. Returns [B, OUTPUT] in x.dtype."""
    B, F = x.shape
    assert F == INPUT_SIZE

    x_aug = _augment_x(x)                               # [B, K_PAD]
    TB = _pick_tb(B)
    nb = pl.cdiv(B, TB)

    out_shape = jax.ShapeDtypeStruct((B, OUTPUT_SIZE), x.dtype)

    return pl.pallas_call(
        _mlp_kernel,
        out_shape=out_shape,
        grid_spec=pltpu.PrefetchScalarGridSpec(
            num_scalar_prefetch=0,
            grid=(nb,),
            in_specs=[
                pl.BlockSpec((TB, K_PAD), lambda i: (i, 0)),             # x tile
                pl.BlockSpec((K_PAD, HIDDEN_SIZE), lambda i: (0, 0)),    # w1 resident
                pl.BlockSpec((1, HIDDEN_SIZE), lambda i: (0, 0)),        # w2 row resident
                pl.BlockSpec((1, OUTPUT_SIZE), lambda i: (0, 0)),        # b2 resident
            ],
            out_specs=pl.BlockSpec((TB, OUTPUT_SIZE), lambda i: (i, 0)),
        ),
        compiler_params=pltpu.CompilerParams(
            dimension_semantics=("parallel",),
            # Chunked temps keep footprint well under this; explicit limit so
            # large TB clears v5e's 16 MiB scoped default while staying inside
            # v7x's 64 MiB/TC physical VMEM.
            vmem_limit_bytes=40 * 1024 * 1024,
        ),
    )(x_aug, w1_aug_bf16, w2_row, b2)


def _ref_forward(x, w1_aug_bf16, w2_row, b2):
    # Matched-precision reference: same bf16-rounded augmented fc1 operands,
    # f32 accumulation.
    x_aug = _augment_x(x)
    h = jnp.dot(x_aug.astype(jnp.bfloat16).astype(jnp.float32),
                w1_aug_bf16.astype(jnp.float32))
    h = jnp.maximum(h, 0.0)
    y = jnp.sum(h * w2_row, axis=-1, keepdims=True) + b2
    return y.astype(x.dtype)


if __name__ == "__main__":
    key = jax.random.PRNGKey(0)
    k_x, k_w1, k_b1, k_w2, k_b2 = jax.random.split(key, 5)

    B = 8  # small batch for the self-test
    x = jax.random.normal(k_x, (B, INPUT_SIZE), dtype=jnp.float32)

    # Deterministic PyTorch-style init: U(-1/sqrt(fan_in), 1/sqrt(fan_in)).
    bound1 = 1.0 / (INPUT_SIZE ** 0.5)
    w1 = jax.random.uniform(k_w1, (INPUT_SIZE, HIDDEN_SIZE),
                            minval=-bound1, maxval=bound1, dtype=jnp.float32)
    b1 = jax.random.uniform(k_b1, (1, HIDDEN_SIZE),
                            minval=-bound1, maxval=bound1, dtype=jnp.float32)

    bound2 = 1.0 / (HIDDEN_SIZE ** 0.5)
    # fc2 weight stored as a [1, HIDDEN] row (transpose of (in, out) = (H, 1)).
    w2_row = jax.random.uniform(k_w2, (1, HIDDEN_SIZE),
                                minval=-bound2, maxval=bound2, dtype=jnp.float32)
    b2 = jax.random.uniform(k_b2, (1, OUTPUT_SIZE),
                            minval=-bound2, maxval=bound2, dtype=jnp.float32)

    # One-time packing: fold b1 into bf16 W1 (ones-column trick), K padded to 40.
    w1_aug_bf16, w2_row_p, b2_p = prepare_params(w1, b1, w2_row, b2)

    out = linear_net_forward(x, w1_aug_bf16, w2_row_p, b2_p)
    out = jax.block_until_ready(out)

    ref = _ref_forward(x, w1_aug_bf16, w2_row_p, b2_p)
    assert out.shape == (B, OUTPUT_SIZE), out.shape
    assert jnp.allclose(out, ref, atol=1e-3, rtol=1e-3), \
        float(jnp.max(jnp.abs(out - ref)))

    print("KERNEL_OK")
</pallas_src>

<mosaic_0001>
module attributes {stable_mosaic.version = 11 : i64} {
  func.func @_mlp_kernel(%arg0: i32, %arg1: memref<8x40xf32, #tpu.memory_space<vmem>>, %arg2: memref<40x2048xbf16, #tpu.memory_space<vmem>>, %arg3: memref<1x2048xf32, #tpu.memory_space<vmem>>, %arg4: memref<1x1xf32, #tpu.memory_space<vmem>>, %arg5: memref<8x1xf32, #tpu.memory_space<vmem>>) attributes {dimension_semantics = [#tpu.dimension_semantics<parallel>], iteration_bounds = array<i64: 1>, scalar_prefetch = 0 : i64, scratch_operands = 0 : i64, tpu.core_type = #tpu.core_type<tc>, window_params = [{transform_indices = @transform_0, window_bounds = array<i64: 8, 40>}, {pipeline_mode = #tpu.pipeline_mode<synchronous>, transform_indices = @transform_1, window_bounds = array<i64: 40, 2048>}, {pipeline_mode = #tpu.pipeline_mode<synchronous>, transform_indices = @transform_2, window_bounds = array<i64: 1, 2048>}, {pipeline_mode = #tpu.pipeline_mode<synchronous>, transform_indices = @transform_3, window_bounds = array<i64: 1, 1>}, {transform_indices = @transform_4, window_bounds = array<i64: 8, 1>}]} {
    %c0 = arith.constant 0 : index
    %c0_0 = arith.constant 0 : index
    %0 = vector.load %arg1[%c0, %c0_0] : memref<8x40xf32, #tpu.memory_space<vmem>>, vector<8x40xf32>
    %1 = arith.truncf %0 : vector<8x40xf32> to vector<8x40xbf16>
    %cst = arith.constant 0.000000e+00 : f32
    %2 = vector.broadcast %cst : f32 to vector<8x128xf32>
    %c0_1 = arith.constant 0 : index
    %c0_2 = arith.constant 0 : index
    %3 = vector.load %arg2[%c0_1, %c0_2] : memref<40x2048xbf16, #tpu.memory_space<vmem>>, vector<40x512xbf16>
    %cst_3 = arith.constant dense<0.000000e+00> : vector<8x512xf32>
    %4 = tpu.matmul %1, %3, %cst_3 {dimension_numbers = #tpu.dot_dimension_numbers<[1], [0], [0], [1], [0, 0, 1, 1], [], []>} : vector<8x40xbf16>, vector<40x512xbf16>, vector<8x512xf32> -> vector<8x512xf32>
    %cst_4 = arith.constant 0.000000e+00 : f32
    %5 = vector.broadcast %cst_4 : f32 to vector<8x512xf32>
    %6 = arith.maximumf %4, %5 : vector<8x512xf32>
    %c0_5 = arith.constant 0 : index
    %c0_6 = arith.constant 0 : index
    %7 = vector.load %arg3[%c0_5, %c0_6] : memref<1x2048xf32, #tpu.memory_space<vmem>>, vector<1x512xf32>
    %8 = vector.broadcast %7 : vector<1x512xf32> to vector<8x512xf32>
    %9 = arith.mulf %6, %8 : vector<8x512xf32>
    %10 = vector.extract_strided_slice %9 {offsets = [0, 0], sizes = [8, 128], strides = [1, 1]} : vector<8x512xf32> to vector<8x128xf32>
    %11 = arith.addf %2, %10 : vector<8x128xf32>
    %12 = vector.extract_strided_slice %9 {offsets = [0, 128], sizes = [8, 128], strides = [1, 1]} : vector<8x512xf32> to vector<8x128xf32>
    %13 = arith.addf %11, %12 : vector<8x128xf32>
    %14 = vector.extract_strided_slice %9 {offsets = [0, 256], sizes = [8, 128], strides = [1, 1]} : vector<8x512xf32> to vector<8x128xf32>
    %15 = arith.addf %13, %14 : vector<8x128xf32>
    %16 = vector.extract_strided_slice %9 {offsets = [0, 384], sizes = [8, 128], strides = [1, 1]} : vector<8x512xf32> to vector<8x128xf32>
    %17 = arith.addf %15, %16 : vector<8x128xf32>
    %c0_7 = arith.constant 0 : index
    %c512 = arith.constant 512 : index
    %18 = vector.load %arg2[%c0_7, %c512] : memref<40x2048xbf16, #tpu.memory_space<vmem>>, vector<40x512xbf16>
    %cst_8 = arith.constant dense<0.000000e+00> : vector<8x512xf32>
    %19 = tpu.matmul %1, %18, %cst_8 {dimension_numbers = #tpu.dot_dimension_numbers<[1], [0], [0], [1], [0, 0, 1, 1], [], []>} : vector<8x40xbf16>, vector<40x512xbf16>, vector<8x512xf32> -> vector<8x512xf32>
    %cst_9 = arith.constant 0.000000e+00 : f32
    %20 = vector.broadcast %cst_9 : f32 to vector<8x512xf32>
    %21 = arith.maximumf %19, %20 : vector<8x512xf32>
    %c0_10 = arith.constant 0 : index
    %c512_11 = arith.constant 512 : index
    %22 = vector.load %arg3[%c0_10, %c512_11] : memref<1x2048xf32, #tpu.memory_space<vmem>>, vector<1x512xf32>
    %23 = vector.broadcast %22 : vector<1x512xf32> to vector<8x512xf32>
    %24 = arith.mulf %21, %23 : vector<8x512xf32>
    %25 = vector.extract_strided_slice %24 {offsets = [0, 0], sizes = [8, 128], strides = [1, 1]} : vector<8x512xf32> to vector<8x128xf32>
    %26 = arith.addf %17, %25 : vector<8x128xf32>
    %27 = vector.extract_strided_slice %24 {offsets = [0, 128], sizes = [8, 128], strides = [1, 1]} : vector<8x512xf32> to vector<8x128xf32>
    %28 = arith.addf %26, %27 : vector<8x128xf32>
    %29 = vector.extract_strided_slice %24 {offsets = [0, 256], sizes = [8, 128], strides = [1, 1]} : vector<8x512xf32> to vector<8x128xf32>
    %30 = arith.addf %28, %29 : vector<8x128xf32>
    %31 = vector.extract_strided_slice %24 {offsets = [0, 384], sizes = [8, 128], strides = [1, 1]} : vector<8x512xf32> to vector<8x128xf32>
    %32 = arith.addf %30, %31 : vector<8x128xf32>
    %c0_12 = arith.constant 0 : index
    %c1024 = arith.constant 1024 : index
    %33 = vector.load %arg2[%c0_12, %c1024] : memref<40x2048xbf16, #tpu.memory_space<vmem>>, vector<40x512xbf16>
    %cst_13 = arith.constant dense<0.000000e+00> : vector<8x512xf32>
    %34 = tpu.matmul %1, %33, %cst_13 {dimension_numbers = #tpu.dot_dimension_numbers<[1], [0], [0], [1], [0, 0, 1, 1], [], []>} : vector<8x40xbf16>, vector<40x512xbf16>, vector<8x512xf32> -> vector<8x512xf32>
    %cst_14 = arith.constant 0.000000e+00 : f32
    %35 = vector.broadcast %cst_14 : f32 to vector<8x512xf32>
    %36 = arith.maximumf %34, %35 : vector<8x512xf32>
    %c0_15 = arith.constant 0 : index
    %c1024_16 = arith.constant 1024 : index
    %37 = vector.load %arg3[%c0_15, %c1024_16] : memref<1x2048xf32, #tpu.memory_space<vmem>>, vector<1x512xf32>
    %38 = vector.broadcast %37 : vector<1x512xf32> to vector<8x512xf32>
    %39 = arith.mulf %36, %38 : vector<8x512xf32>
    %40 = vector.extract_strided_slice %39 {offsets = [0, 0], sizes = [8, 128], strides = [1, 1]} : vector<8x512xf32> to vector<8x128xf32>
    %41 = arith.addf %32, %40 : vector<8x128xf32>
    %42 = vector.extract_strided_slice %39 {offsets = [0, 128], sizes = [8, 128], strides = [1, 1]} : vector<8x512xf32> to vector<8x128xf32>
    %43 = arith.addf %41, %42 : vector<8x128xf32>
    %44 = vector.extract_strided_slice %39 {offsets = [0, 256], sizes = [8, 128], strides = [1, 1]} : vector<8x512xf32> to vector<8x128xf32>
    %45 = arith.addf %43, %44 : vector<8x128xf32>
    %46 = vector.extract_strided_slice %39 {offsets = [0, 384], sizes = [8, 128], strides = [1, 1]} : vector<8x512xf32> to vector<8x128xf32>
    %47 = arith.addf %45, %46 : vector<8x128xf32>
    %c0_17 = arith.constant 0 : index
    %c1536 = arith.constant 1536 : index
    %48 = vector.load %arg2[%c0_17, %c1536] : memref<40x2048xbf16, #tpu.memory_space<vmem>>, vector<40x512xbf16>
    %cst_18 = arith.constant dense<0.000000e+00> : vector<8x512xf32>
    %49 = tpu.matmul %1, %48, %cst_18 {dimension_numbers = #tpu.dot_dimension_numbers<[1], [0], [0], [1], [0, 0, 1, 1], [], []>} : vector<8x40xbf16>, vector<40x512xbf16>, vector<8x512xf32> -> vector<8x512xf32>
    %cst_19 = arith.constant 0.000000e+00 : f32
    %50 = vector.broadcast %cst_19 : f32 to vector<8x512xf32>
    %51 = arith.maximumf %49, %50 : vector<8x512xf32>
    %c0_20 = arith.constant 0 : index
    %c1536_21 = arith.constant 1536 : index
    %52 = vector.load %arg3[%c0_20, %c1536_21] : memref<1x2048xf32, #tpu.memory_space<vmem>>, vector<1x512xf32>
    %53 = vector.broadcast %52 : vector<1x512xf32> to vector<8x512xf32>
    %54 = arith.mulf %51, %53 : vector<8x512xf32>
    %55 = vector.extract_strided_slice %54 {offsets = [0, 0], sizes = [8, 128], strides = [1, 1]} : vector<8x512xf32> to vector<8x128xf32>
    %56 = arith.addf %47, %55 : vector<8x128xf32>
    %57 = vector.extract_strided_slice %54 {offsets = [0, 128], sizes = [8, 128], strides = [1, 1]} : vector<8x512xf32> to vector<8x128xf32>
    %58 = arith.addf %56, %57 : vector<8x128xf32>
    %59 = vector.extract_strided_slice %54 {offsets = [0, 256], sizes = [8, 128], strides = [1, 1]} : vector<8x512xf32> to vector<8x128xf32>
    %60 = arith.addf %58, %59 : vector<8x128xf32>
    %61 = vector.extract_strided_slice %54 {offsets = [0, 384], sizes = [8, 128], strides = [1, 1]} : vector<8x512xf32> to vector<8x128xf32>
    %62 = arith.addf %60, %61 : vector<8x128xf32>
    %cst_22 = arith.constant dense<0.000000e+00> : vector<8xf32>
    %63 = vector.multi_reduction <add>, %62, %cst_22 [1] : vector<8x128xf32> to vector<8xf32>
    %64 = vector.shape_cast %63 : vector<8xf32> to vector<8x1xf32>
    %c0_23 = arith.constant 0 : index
    %c0_24 = arith.constant 0 : index
    %65 = vector.load %arg4[%c0_23, %c0_24] : memref<1x1xf32, #tpu.memory_space<vmem>>, vector<1x1xf32>
    %66 = vector.broadcast %65 : vector<1x1xf32> to vector<8x1xf32>
    %67 = arith.addf %64, %66 : vector<8x1xf32>
    %c0_25 = arith.constant 0 : index
    %c0_26 = arith.constant 0 : index
    %68 = vector.load %arg5[%c0_25, %c0_26] : memref<8x1xf32, #tpu.memory_space<vmem>>, vector<8x1xf32>
    tpu.vector_store %arg5[%c0_25, %c0_26], %67 {strides = array<i32>} : memref<8x1xf32, #tpu.memory_space<vmem>>, vector<8x1xf32>,
    return
  }
  func.func @transform_0(%arg0: i32) -> (i32, i32) {
    %c0_i32 = arith.constant 0 : i32
    %c0_i32_0 = arith.constant 0 : i32
    return %arg0, %c0_i32 : i32, i32
  }
  func.func @transform_1(%arg0: i32) -> (i32, i32) {
    %c0_i32 = arith.constant 0 : i32
    %c0_i32_0 = arith.constant 0 : i32
    %c0_i32_1 = arith.constant 0 : i32
    return %c0_i32, %c0_i32_0 : i32, i32
  }
  func.func @transform_2(%arg0: i32) -> (i32, i32) {
    %c0_i32 = arith.constant 0 : i32
    %c0_i32_0 = arith.constant 0 : i32
    %c0_i32_1 = arith.constant 0 : i32
    return %c0_i32, %c0_i32_0 : i32, i32
  }
  func.func @transform_3(%arg0: i32) -> (i32, i32) {
    %c0_i32 = arith.constant 0 : i32
    %c0_i32_0 = arith.constant 0 : i32
    %c0_i32_1 = arith.constant 0 : i32
    return %c0_i32, %c0_i32_0 : i32, i32
  }
  func.func @transform_4(%arg0: i32) -> (i32, i32) {
    %c0_i32 = arith.constant 0 : i32
    %c0_i32_0 = arith.constant 0 : i32
    return %arg0, %c0_i32 : i32, i32
  }
}

</mosaic_0001>

<llo_original>
// kernel: linear_net_forward.1
$region0: #{linear_net_forward.1}
  #allocation0 [shape = 'u32[]', space=smem, size = 0x4, offset = 0x4, fixed_abs, tag = 'smem constant byte address 0x4 - core index']
  #allocation1 [shape = 'u32[144,128]{1,0:T(1,128)}', space=vmem, size = 0x12000, scoped, tag = 'internal scratch']
  #allocation2 [shape = 'f32[1,1]{1,0:T(1,128)S(1)}', space=vmem, size = 0x200, scoped, tag = 'scoped memory for linear_net_forward.1']
  %s0 = inlined_call_operand.vmem [shape: f32[8,40], index: 0, kind: input, shape index: {}]
  %s1 = inlined_call_operand.hbm [shape: bf16[40,2048], index: 1, kind: input, shape index: {}]
  %s2 = inlined_call_operand.vmem [shape: f32[1,2048], index: 2, kind: input, shape index: {}]
  %s3 = inlined_call_operand.<no memory space> [shape: f32[1,1], index: 3, kind: input, shape index: {}]
  %s4 = inlined_call_operand.vmem [shape: f32[8,1], index: 4, kind: output, shape index: {}]
  %s5 = sld [smem:[#allocation0]]
  $region30: #{linear_net_forward.1} parent=0
    _
  %s7 = ssub.s32 1, %s5
  %s8 = scalar_select 0, %s7, %s5
  %v9 = vstv %s3
  %10 = vst [vmem:[#allocation2] sm:$0x1] %v9
  $region1: #{linear_net_forward.1} parent=0
    #allocation3 [shape = 'u8[163840]{0}', space=vmem, size = 0x28000, scoped, tag = 'input window, operand 1, single buffered']
    #allocation4 [shape = 's32[1]{0}', space=sflag, size = 0x4, scoped, tag = 'scoped memory for linear_net_forward.1']
    %11 = vsyncpa [#allocation4], 0
    // Predicated region
    $region2: #{linear_net_forward.1} parent=1 // pred_check
      _
    $region3: #{linear_net_forward.1} parent=1 // pred_check_branch
      %13 = sbr.rel (0) target = $region5
    $region4: #{linear_net_forward.1} parent=1 // pred_region
      _
    $region5: #{linear_net_forward.1} parent=1 // pred_fallthru
      _
    // Predicated region
    $region6: #{linear_net_forward.1} parent=1 // pred_check
      _
    $region7: #{linear_net_forward.1} parent=1 // pred_check_branch
      %15 = sbr.rel (0) target = $region9
    $region8: #{linear_net_forward.1} parent=1 // pred_region
      %s17 = ssub.s32 5120, 5120
      %18 = vsyncadd [#allocation4], %s17
      %s19 = sshll.u32 [#allocation3], 4
      %s20 = int_to_ptr.vmem [resolvable:$true] %s19
      %25 = dma.hbm_to_vmem [thread:$0]  %s1, 5120, %s20, [#allocation4], 1024, 1024, 64
    $region9: #{linear_net_forward.1} parent=1 // pred_fallthru
      _
    // Predicated region
    $region10: #{linear_net_forward.1} parent=1 // pred_check
      _
    $region11: #{linear_net_forward.1} parent=1 // pred_check_branch
      %27 = sbr.rel (0) target = $region13
    $region12: #{linear_net_forward.1} parent=1 // pred_region
      _
    $region13: #{linear_net_forward.1} parent=1 // pred_fallthru
      _
    // Predicated region
    $region14: #{linear_net_forward.1} parent=1 // pred_check
      _
    $region15: #{linear_net_forward.1} parent=1 // pred_check_branch
      %29 = sbr.rel (0) target = $region17
    $region16: #{linear_net_forward.1} parent=1 // pred_region
      _
    $region17: #{linear_net_forward.1} parent=1 // pred_fallthru
      _
    // Predicated region
    $region18: #{linear_net_forward.1} parent=1 // pred_check
      _
    $region19: #{linear_net_forward.1} parent=1 // pred_check_branch
      %31 = sbr.rel (0) target = $region21
    $region20: #{linear_net_forward.1} parent=1 // pred_region
      %32 = dma.done [#allocation4], 5120
    $region21: #{linear_net_forward.1} parent=1 // pred_fallthru
      _
    %v34 = vld [vmem:[%s0] sm:$0xff]
    %v35 = vpack.c.bf16 %v34, %v34
    %v36 = vld [vmem:[#allocation3] sm:$0xff]
    %v37 = vld [vmem:[#allocation3 + $0x8] sm:$0xff]
    %v38 = vld [vmem:[#allocation3 + $0x40] sm:$0xff]
    %v39 = vld [vmem:[#allocation3 + $0x48] sm:$0xff]
    %v40 = vld [vmem:[#allocation3 + $0x80] sm:$0xff]
    %v41 = vld [vmem:[#allocation3 + $0x88] sm:$0xff]
    %v42 = vld [vmem:[#allocation3 + $0xc0] sm:$0xff]
    %v43 = vld [vmem:[#allocation3 + $0xc8] sm:$0xff]
    %v44 = vld [vmem:[#allocation3 + $0x100] sm:$0xff]
    %v45 = vld [vmem:[#allocation3 + $0x108] sm:$0xff]
    %v56 = vunpack.c.l.b16 %v36
    %v57 = vunpack.c.h.b16 %v36
    %v58 = vunpack.c.l.b16 %v37
    %v59 = vunpack.c.h.b16 %v37
    %v60 = vunpack.c.l.b16 %v38
    %v61 = vunpack.c.h.b16 %v38
    %v62 = vunpack.c.l.b16 %v39
    %v63 = vunpack.c.h.b16 %v39
    %v64 = vunpack.c.l.b16 %v40
    %v65 = vunpack.c.h.b16 %v40
    %v66 = vunpack.c.l.b16 %v41
    %v67 = vunpack.c.h.b16 %v41
    %v68 = vunpack.c.l.b16 %v42
    %v69 = vunpack.c.h.b16 %v42
    %v70 = vunpack.c.l.b16 %v43
    %v71 = vunpack.c.h.b16 %v43
    %v72 = vunpack.c.l.b16 %v44
    %v73 = vunpack.c.h.b16 %v44
    %v74 = vunpack.c.l.b16 %v45
    %v75 = vunpack.c.h.b16 %v45
    %v76 = vpack.c.b16 %v60, %v56
    %v77 = vpack.c.b16 %v61, %v57
    %v78 = vpack.c.b16 %v62, %v58
    %v79 = vpack.c.b16 %v63, %v59
    %v80 = vpack.c.b16 %v68, %v64
    %v81 = vpack.c.b16 %v69, %v65
    %v82 = vpack.c.b16 %v70, %v66
    %v83 = vpack.c.b16 %v71, %v67
    %v84 = vpack.c.b16 %v72, %v72
    %v85 = vpack.c.b16 %v73, %v73
    %v86 = vpack.c.b16 %v74, %v74
    %v87 = vpack.c.b16 %v75, %v75
    %vm96 = vcmask 326656
    %v98 = vsel %vm96, %v35, 0
    %vm100 = vcmask 1043456
    %v102 = vsel %vm100, %v84, 0
    %v105 = vsel %vm100, %v85, 0
    %v108 = vsel %vm100, %v86, 0
    %v111 = vsel %vm100, %v87, 0
    %113 = vmatprep.subr.bf16.mxu0 %v77
    %114 = vmatpush1.bf16.msra.mxu0 %v76
    %115 = vmatprep.subr.bf16.mxu0 %v81
    %116 = vmatpush1.bf16.msra.mxu0 %v80
    %117 = vmatprep.subr.bf16.mxu0 %v105
    %118 = vmatpush1.bf16.msra.mxu0 %v102
    %119 = vmatprep.subr.bf16.mxu0 0
    %120 = vmatpush1.bf16.msra.mxu0 0
    %121 = vmatprep.subr.bf16.mxu0 0
    %122 = vmatpush1.bf16.msra.mxu0 0
    %123 = vmatprep.subr.bf16.mxu0 0
    %124 = vmatpush1.bf16.msra.mxu0 0
    %125 = vmatprep.subr.bf16.mxu0 0
    %126 = vmatpush1.bf16.msra.mxu0 0
    %127 = vmatprep.subr.bf16.mxu0 0
    %128 = vmatpush1.bf16.msra.mxu0 0
    %129 = vmatprep.subr.bf16.mxu0 0
    %130 = vmatpush1.bf16.msra.mxu0 0
    %131 = vmatprep.subr.bf16.mxu0 0
    %132 = vmatpush1.bf16.msra.mxu0 0
    %133 = vmatprep.subr.bf16.mxu0 0
    %134 = vmatpush1.bf16.msra.mxu0 0
    %135 = vmatprep.subr.bf16.mxu0 0
    %136 = vmatpush1.bf16.msra.mxu0 0
    %137 = vmatprep.subr.bf16.mxu0 0
    %138 = vmatpush1.bf16.msra.mxu0 0
    %139 = vmatprep.subr.bf16.mxu0 0
    %140 = vmatpush1.bf16.msra.mxu0 0
    %141 = vmatprep.subr.bf16.mxu0 0
    %142 = vmatpush1.bf16.msra.mxu0 0
    %143 = vmatprep.subr.bf16.mxu0 0
    %144 = vmatpush1.bf16.msra.mxu0 0
    %145 = vmatprep.mubr.bf16.mxu0 0
    %146 = vmatmul.mubr.bf16.gmra.mrb[0].mxu0 %v98
    %v147 = vpop.f32.mrb[0].mxu0
    %v148 = vadd.f32 0.0, %v147
    %v149 = vpop.f32.mrb[0].mxu0
    %v150 = vadd.f32 0.0, %v149
    %v151 = vpop.f32.mrb[0].mxu0
    %v152 = vpop.f32.mrb[0].mxu0
    %153 = vdwg.mxu0
    %154 = vmatprep.subr.bf16.mxu0 %v79
    %155 = vmatpush1.bf16.msra.mxu0 %v78
    %156 = vmatprep.subr.bf16.mxu0 %v83
    %157 = vmatpush1.bf16.msra.mxu0 %v82
    %158 = vmatprep.subr.bf16.mxu0 %v111
    %159 = vmatpush1.bf16.msra.mxu0 %v108
    %160 = vmatprep.subr.bf16.mxu0 0
    %161 = vmatpush1.bf16.msra.mxu0 0
    %162 = vmatprep.subr.bf16.mxu0 0
    %163 = vmatpush1.bf16.msra.mxu0 0
    %164 = vmatprep.subr.bf16.mxu0 0
    %165 = vmatpush1.bf16.msra.mxu0 0
    %166 = vmatprep.subr.bf16.mxu0 0
    %167 = vmatpush1.bf16.msra.mxu0 0
    %168 = vmatprep.subr.bf16.mxu0 0
    %169 = vmatpush1.bf16.msra.mxu0 0
    %170 = vmatprep.subr.bf16.mxu0 0
    %171 = vmatpush1.bf16.msra.mxu0 0
    %172 = vmatprep.subr.bf16.mxu0 0
    %173 = vmatpush1.bf16.msra.mxu0 0
    %174 = vmatprep.subr.bf16.mxu0 0
    %175 = vmatpush1.bf16.msra.mxu0 0
    %176 = vmatprep.subr.bf16.mxu0 0
    %177 = vmatpush1.bf16.msra.mxu0 0
    %178 = vmatprep.subr.bf16.mxu0 0
    %179 = vmatpush1.bf16.msra.mxu0 0
    %180 = vmatprep.subr.bf16.mxu0 0
    %181 = vmatpush1.bf16.msra.mxu0 0
    %182 = vmatprep.subr.bf16.mxu0 0
    %183 = vmatpush1.bf16.msra.mxu0 0
    %184 = vmatprep.subr.bf16.mxu0 0
    %185 = vmatpush1.bf16.msra.mxu0 0
    %186 = vmatprep.mubr.bf16.mxu0 0
    %187 = vmatmul.mubr.bf16.gmra.mrb[0].mxu0 %v98
    %v188 = vpop.f32.mrb[0].mxu0
    %v189 = vadd.f32 0.0, %v188
    %v190 = vpop.f32.mrb[0].mxu0
    %v191 = vadd.f32 0.0, %v190
    %v192 = vpop.f32.mrb[0].mxu0
    %v193 = vpop.f32.mrb[0].mxu0
    %194 = vdwg.mxu0
    %v195 = vmax.f32 %v148, 0.0
    %v196 = vmax.f32 %v150, 0.0
    %v197 = vmax.f32 %v189, 0.0
    %v198 = vmax.f32 %v191, 0.0
    %v199 = vld [vmem:[%s2] sm:$0xf]
    %v201 = vlaneseq
    %v202 = vshrl.u32 %v201, 7
    %v203 = vsub.s32 0, %v202
    %v204 = vrot.slane %v199, %v203
    %v205 = vlaneseq
    %v206 = vshrl.u32 %v205, 7
    %v207 = vsub.s32 1, %v206
    %v208 = vrot.slane %v199, %v207
    %v209 = vlaneseq
    %v210 = vshrl.u32 %v209, 7
    %v211 = vsub.s32 2, %v210
    %v212 = vrot.slane %v199, %v211
    %v213 = vlaneseq
    %v214 = vshrl.u32 %v213, 7
    %v215 = vsub.s32 3, %v214
    %v216 = vrot.slane %v199, %v215
    %v221 = vmul.f32 %v195, %v204
    %v222 = vmul.f32 %v196, %v208
    %v223 = vmul.f32 %v197, %v212
    %v224 = vmul.f32 %v198, %v216
    %v225 = vadd.f32 %v221, 0.0
    %v226 = vadd.f32 %v225, %v222
    %v227 = vadd.f32 %v226, %v223
    %v228 = vadd.f32 %v227, %v224
    %v229 = vld [vmem:[#allocation3 + $0x10] sm:$0xff]
    %v230 = vld [vmem:[#allocation3 + $0x18] sm:$0xff]
    %v231 = vld [vmem:[#allocation3 + $0x50] sm:$0xff]
    %v232 = vld [vmem:[#allocation3 + $0x58] sm:$0xff]
    %v233 = vld [vmem:[#allocation3 + $0x90] sm:$0xff]
    %v234 = vld [vmem:[#allocation3 + $0x98] sm:$0xff]
    %v235 = vld [vmem:[#allocation3 + $0xd0] sm:$0xff]
    %v236 = vld [vmem:[#allocation3 + $0xd8] sm:$0xff]
    %v237 = vld [vmem:[#allocation3 + $0x110] sm:$0xff]
    %v238 = vld [vmem:[#allocation3 + $0x118] sm:$0xff]
    %v249 = vunpack.c.l.b16 %v229
    %v250 = vunpack.c.h.b16 %v229
    %v251 = vunpack.c.l.b16 %v230
    %v252 = vunpack.c.h.b16 %v230
    %v253 = vunpack.c.l.b16 %v231
    %v254 = vunpack.c.h.b16 %v231
    %v255 = vunpack.c.l.b16 %v232
    %v256 = vunpack.c.h.b16 %v232
    %v257 = vunpack.c.l.b16 %v233
    %v258 = vunpack.c.h.b16 %v233
    %v259 = vunpack.c.l.b16 %v234
    %v260 = vunpack.c.h.b16 %v234
    %v261 = vunpack.c.l.b16 %v235
    %v262 = vunpack.c.h.b16 %v235
    %v263 = vunpack.c.l.b16 %v236
    %v264 = vunpack.c.h.b16 %v236
    %v265 = vunpack.c.l.b16 %v237
    %v266 = vunpack.c.h.b16 %v237
    %v267 = vunpack.c.l.b16 %v238
    %v268 = vunpack.c.h.b16 %v238
    %v269 = vpack.c.b16 %v253, %v249
    %v270 = vpack.c.b16 %v254, %v250
    %v271 = vpack.c.b16 %v255, %v251
    %v272 = vpack.c.b16 %v256, %v252
    %v273 = vpack.c.b16 %v261, %v257
    %v274 = vpack.c.b16 %v262, %v258
    %v275 = vpack.c.b16 %v263, %v259
    %v276 = vpack.c.b16 %v264, %v260
    %v277 = vpack.c.b16 %v265, %v265
    %v278 = vpack.c.b16 %v266, %v266
    %v279 = vpack.c.b16 %v267, %v267
    %v280 = vpack.c.b16 %v268, %v268
    %v290 = vsel %vm100, %v277, 0
    %v293 = vsel %vm100, %v278, 0
    %v296 = vsel %vm100, %v279, 0
    %v299 = vsel %vm100, %v280, 0
    %301 = vmatprep.subr.bf16.mxu0 %v270
    %302 = vmatpush1.bf16.msra.mxu0 %v269
    %303 = vmatprep.subr.bf16.mxu0 %v274
    %304 = vmatpush1.bf16.msra.mxu0 %v273
    %305 = vmatprep.subr.bf16.mxu0 %v293
    %306 = vmatpush1.bf16.msra.mxu0 %v290
    %307 = vmatprep.subr.bf16.mxu0 0
    %308 = vmatpush1.bf16.msra.mxu0 0
    %309 = vmatprep.subr.bf16.mxu0 0
    %310 = vmatpush1.bf16.msra.mxu0 0
    %311 = vmatprep.subr.bf16.mxu0 0
    %312 = vmatpush1.bf16.msra.mxu0 0
    %313 = vmatprep.subr.bf16.mxu0 0
    %314 = vmatpush1.bf16.msra.mxu0 0
    %315 = vmatprep.subr.bf16.mxu0 0
    %316 = vmatpush1.bf16.msra.mxu0 0
    %317 = vmatprep.subr.bf16.mxu0 0
    %318 = vmatpush1.bf16.msra.mxu0 0
    %319 = vmatprep.subr.bf16.mxu0 0
    %320 = vmatpush1.bf16.msra.mxu0 0
    %321 = vmatprep.subr.bf16.mxu0 0
    %322 = vmatpush1.bf16.msra.mxu0 0
    %323 = vmatprep.subr.bf16.mxu0 0
    %324 = vmatpush1.bf16.msra.mxu0 0
    %325 = vmatprep.subr.bf16.mxu0 0
    %326 = vmatpush1.bf16.msra.mxu0 0
    %327 = vmatprep.subr.bf16.mxu0 0
    %328 = vmatpush1.bf16.msra.mxu0 0
    %329 = vmatprep.subr.bf16.mxu0 0
    %330 = vmatpush1.bf16.msra.mxu0 0
    %331 = vmatprep.subr.bf16.mxu0 0
    %332 = vmatpush1.bf16.msra.mxu0 0
    %333 = vmatprep.mubr.bf16.mxu0 0
    %334 = vmatmul.mubr.bf16.gmra.mrb[0].mxu0 %v98
    %v335 = vpop.f32.mrb[0].mxu0
    %v336 = vadd.f32 0.0, %v335
    %v337 = vpop.f32.mrb[0].mxu0
    %v338 = vadd.f32 0.0, %v337
    %v339 = vpop.f32.mrb[0].mxu0
    %v340 = vpop.f32.mrb[0].mxu0
    %341 = vdwg.mxu0
    %342 = vmatprep.subr.bf16.mxu0 %v272
    %343 = vmatpush1.bf16.msra.mxu0 %v271
    %344 = vmatprep.subr.bf16.mxu0 %v276
    %345 = vmatpush1.bf16.msra.mxu0 %v275
    %346 = vmatprep.subr.bf16.mxu0 %v299
    %347 = vmatpush1.bf16.msra.mxu0 %v296
    %348 = vmatprep.subr.bf16.mxu0 0
    %349 = vmatpush1.bf16.msra.mxu0 0
    %350 = vmatprep.subr.bf16.mxu0 0
    %351 = vmatpush1.bf16.msra.mxu0 0
    %352 = vmatprep.subr.bf16.mxu0 0
    %353 = vmatpush1.bf16.msra.mxu0 0
    %354 = vmatprep.subr.bf16.mxu0 0
    %355 = vmatpush1.bf16.msra.mxu0 0
    %356 = vmatprep.subr.bf16.mxu0 0
    %357 = vmatpush1.bf16.msra.mxu0 0
    %358 = vmatprep.subr.bf16.mxu0 0
    %359 = vmatpush1.bf16.msra.mxu0 0
    %360 = vmatprep.subr.bf16.mxu0 0
    %361 = vmatpush1.bf16.msra.mxu0 0
    %362 = vmatprep.subr.bf16.mxu0 0
    %363 = vmatpush1.bf16.msra.mxu0 0
    %364 = vmatprep.subr.bf16.mxu0 0
    %365 = vmatpush1.bf16.msra.mxu0 0
    %366 = vmatprep.subr.bf16.mxu0 0
    %367 = vmatpush1.bf16.msra.mxu0 0
    %368 = vmatprep.subr.bf16.mxu0 0
    %369 = vmatpush1.bf16.msra.mxu0 0
    %370 = vmatprep.subr.bf16.mxu0 0
    %371 = vmatpush1.bf16.msra.mxu0 0
    %372 = vmatprep.subr.bf16.mxu0 0
    %373 = vmatpush1.bf16.msra.mxu0 0
    %374 = vmatprep.mubr.bf16.mxu0 0
    %375 = vmatmul.mubr.bf16.gmra.mrb[0].mxu0 %v98
    %v376 = vpop.f32.mrb[0].mxu0
    %v377 = vadd.f32 0.0, %v376
    %v378 = vpop.f32.mrb[0].mxu0
    %v379 = vadd.f32 0.0, %v378
    %v380 = vpop.f32.mrb[0].mxu0
    %v381 = vpop.f32.mrb[0].mxu0
    %382 = vdwg.mxu0
    %v383 = vmax.f32 %v336, 0.0
    %v384 = vmax.f32 %v338, 0.0
    %v385 = vmax.f32 %v377, 0.0
    %v386 = vmax.f32 %v379, 0.0
    %v387 = vld [vmem:[%s2 + $0x4] sm:$0xf]
    %v389 = vlaneseq
    %v390 = vshrl.u32 %v389, 7
    %v391 = vsub.s32 0, %v390
    %v392 = vrot.slane %v387, %v391
    %v393 = vlaneseq
    %v394 = vshrl.u32 %v393, 7
    %v395 = vsub.s32 1, %v394
    %v396 = vrot.slane %v387, %v395
    %v397 = vlaneseq
    %v398 = vshrl.u32 %v397, 7
    %v399 = vsub.s32 2, %v398
    %v400 = vrot.slane %v387, %v399
    %v401 = vlaneseq
    %v402 = vshrl.u32 %v401, 7
    %v403 = vsub.s32 3, %v402
    %v404 = vrot.slane %v387, %v403
    %v409 = vmul.f32 %v383, %v392
    %v410 = vmul.f32 %v384, %v396
    %v411 = vmul.f32 %v385, %v400
    %v412 = vmul.f32 %v386, %v404
    %v413 = vadd.f32 %v228, %v409
    %v414 = vadd.f32 %v413, %v410
    %v415 = vadd.f32 %v414, %v411
    %v416 = vadd.f32 %v415, %v412
    %v417 = vld [vmem:[#allocation3 + $0x20] sm:$0xff]
    %v418 = vld [vmem:[#allocation3 + $0x28] sm:$0xff]
    %v419 = vld [vmem:[#allocation3 + $0x60] sm:$0xff]
    %v420 = vld [vmem:[#allocation3 + $0x68] sm:$0xff]
    %v421 = vld [vmem:[#allocation3 + $0xa0] sm:$0xff]
    %v422 = vld [vmem:[#allocation3 + $0xa8] sm:$0xff]
    %v423 = vld [vmem:[#allocation3 + $0xe0] sm:$0xff]
    %v424 = vld [vmem:[#allocation3 + $0xe8] sm:$0xff]
    %v425 = vld [vmem:[#allocation3 + $0x120] sm:$0xff]
    %v426 = vld [vmem:[#allocation3 + $0x128] sm:$0xff]
    %v437 = vunpack.c.l.b16 %v417
    %v438 = vunpack.c.h.b16 %v417
    %v439 = vunpack.c.l.b16 %v418
    %v440 = vunpack.c.h.b16 %v418
    %v441 = vunpack.c.l.b16 %v419
    %v442 = vunpack.c.h.b16 %v419
    %v443 = vunpack.c.l.b16 %v420
    %v444 = vunpack.c.h.b16 %v420
    %v445 = vunpack.c.l.b16 %v421
    %v446 = vunpack.c.h.b16 %v421
    %v447 = vunpack.c.l.b16 %v422
    %v448 = vunpack.c.h.b16 %v422
    %v449 = vunpack.c.l.b16 %v423
    %v450 = vunpack.c.h.b16 %v423
    %v451 = vunpack.c.l.b16 %v424
    %v452 = vunpack.c.h.b16 %v424
    %v453 = vunpack.c.l.b16 %v425
    %v454 = vunpack.c.h.b16 %v425
    %v455 = vunpack.c.l.b16 %v426
    %v456 = vunpack.c.h.b16 %v426
    %v457 = vpack.c.b16 %v441, %v437
    %v458 = vpack.c.b16 %v442, %v438
    %v459 = vpack.c.b16 %v443, %v439
    %v460 = vpack.c.b16 %v444, %v440
    %v461 = vpack.c.b16 %v449, %v445
    %v462 = vpack.c.b16 %v450, %v446
    %v463 = vpack.c.b16 %v451, %v447
    %v464 = vpack.c.b16 %v452, %v448
    %v465 = vpack.c.b16 %v453, %v453
    %v466 = vpack.c.b16 %v454, %v454
    %v467 = vpack.c.b16 %v455, %v455
    %v468 = vpack.c.b16 %v456, %v456
    %v478 = vsel %vm100, %v465, 0
    %v481 = vsel %vm100, %v466, 0
    %v484 = vsel %vm100, %v467, 0
    %v487 = vsel %vm100, %v468, 0
    %489 = vmatprep.subr.bf16.mxu0 %v458
    %490 = vmatpush1.bf16.msra.mxu0 %v457
    %491 = vmatprep.subr.bf16.mxu0 %v462
    %492 = vmatpush1.bf16.msra.mxu0 %v461
    %493 = vmatprep.subr.bf16.mxu0 %v481
    %494 = vmatpush1.bf16.msra.mxu0 %v478
    %495 = vmatprep.subr.bf16.mxu0 0
    %496 = vmatpush1.bf16.msra.mxu0 0
    %497 = vmatprep.subr.bf16.mxu0 0
    %498 = vmatpush1.bf16.msra.mxu0 0
    %499 = vmatprep.subr.bf16.mxu0 0
    %500 = vmatpush1.bf16.msra.mxu0 0
    %501 = vmatprep.subr.bf16.mxu0 0
    %502 = vmatpush1.bf16.msra.mxu0 0
    %503 = vmatprep.subr.bf16.mxu0 0
    %504 = vmatpush1.bf16.msra.mxu0 0
    %505 = vmatprep.subr.bf16.mxu0 0
    %506 = vmatpush1.bf16.msra.mxu0 0
    %507 = vmatprep.subr.bf16.mxu0 0
    %508 = vmatpush1.bf16.msra.mxu0 0
    %509 = vmatprep.subr.bf16.mxu0 0
    %510 = vmatpush1.bf16.msra.mxu0 0
    %511 = vmatprep.subr.bf16.mxu0 0
    %512 = vmatpush1.bf16.msra.mxu0 0
    %513 = vmatprep.subr.bf16.mxu0 0
    %514 = vmatpush1.bf16.msra.mxu0 0
    %515 = vmatprep.subr.bf16.mxu0 0
    %516 = vmatpush1.bf16.msra.mxu0 0
    %517 = vmatprep.subr.bf16.mxu0 0
    %518 = vmatpush1.bf16.msra.mxu0 0
    %519 = vmatprep.subr.bf16.mxu0 0
    %520 = vmatpush1.bf16.msra.mxu0 0
    %521 = vmatprep.mubr.bf16.mxu0 0
    %522 = vmatmul.mubr.bf16.gmra.mrb[0].mxu0 %v98
    %v523 = vpop.f32.mrb[0].mxu0
    %v524 = vadd.f32 0.0, %v523
    %v525 = vpop.f32.mrb[0].mxu0
    %v526 = vadd.f32 0.0, %v525
    %v527 = vpop.f32.mrb[0].mxu0
    %v528 = vpop.f32.mrb[0].mxu0
    %529 = vdwg.mxu0
    %530 = vmatprep.subr.bf16.mxu0 %v460
    %531 = vmatpush1.bf16.msra.mxu0 %v459
    %532 = vmatprep.subr.bf16.mxu0 %v464
    %533 = vmatpush1.bf16.msra.mxu0 %v463
    %534 = vmatprep.subr.bf16.mxu0 %v487
    %535 = vmatpush1.bf16.msra.mxu0 %v484
    %536 = vmatprep.subr.bf16.mxu0 0
    %537 = vmatpush1.bf16.msra.mxu0 0
    %538 = vmatprep.subr.bf16.mxu0 0
    %539 = vmatpush1.bf16.msra.mxu0 0
    %540 = vmatprep.subr.bf16.mxu0 0
    %541 = vmatpush1.bf16.msra.mxu0 0
    %542 = vmatprep.subr.bf16.mxu0 0
    %543 = vmatpush1.bf16.msra.mxu0 0
    %544 = vmatprep.subr.bf16.mxu0 0
    %545 = vmatpush1.bf16.msra.mxu0 0
    %546 = vmatprep.subr.bf16.mxu0 0
    %547 = vmatpush1.bf16.msra.mxu0 0
    %548 = vmatprep.subr.bf16.mxu0 0
    %549 = vmatpush1.bf16.msra.mxu0 0
    %550 = vmatprep.subr.bf16.mxu0 0
    %551 = vmatpush1.bf16.msra.mxu0 0
    %552 = vmatprep.subr.bf16.mxu0 0
    %553 = vmatpush1.bf16.msra.mxu0 0
    %554 = vmatprep.subr.bf16.mxu0 0
    %555 = vmatpush1.bf16.msra.mxu0 0
    %556 = vmatprep.subr.bf16.mxu0 0
    %557 = vmatpush1.bf16.msra.mxu0 0
    %558 = vmatprep.subr.bf16.mxu0 0
    %559 = vmatpush1.bf16.msra.mxu0 0
    %560 = vmatprep.subr.bf16.mxu0 0
    %561 = vmatpush1.bf16.msra.mxu0 0
    %562 = vmatprep.mubr.bf16.mxu0 0
    %563 = vmatmul.mubr.bf16.gmra.mrb[0].mxu0 %v98
    %v564 = vpop.f32.mrb[0].mxu0
    %v565 = vadd.f32 0.0, %v564
    %v566 = vpop.f32.mrb[0].mxu0
    %v567 = vadd.f32 0.0, %v566
    %v568 = vpop.f32.mrb[0].mxu0
    %v569 = vpop.f32.mrb[0].mxu0
    %570 = vdwg.mxu0
    %v571 = vmax.f32 %v524, 0.0
    %v572 = vmax.f32 %v526, 0.0
    %v573 = vmax.f32 %v565, 0.0
    %v574 = vmax.f32 %v567, 0.0
    %v575 = vld [vmem:[%s2 + $0x8] sm:$0xf]
    %v577 = vlaneseq
    %v578 = vshrl.u32 %v577, 7
    %v579 = vsub.s32 0, %v578
    %v580 = vrot.slane %v575, %v579
    %v581 = vlaneseq
    %v582 = vshrl.u32 %v581, 7
    %v583 = vsub.s32 1, %v582
    %v584 = vrot.slane %v575, %v583
    %v585 = vlaneseq
    %v586 = vshrl.u32 %v585, 7
    %v587 = vsub.s32 2, %v586
    %v588 = vrot.slane %v575, %v587
    %v589 = vlaneseq
    %v590 = vshrl.u32 %v589, 7
    %v591 = vsub.s32 3, %v590
    %v592 = vrot.slane %v575, %v591
    %v597 = vmul.f32 %v571, %v580
    %v598 = vmul.f32 %v572, %v584
    %v599 = vmul.f32 %v573, %v588
    %v600 = vmul.f32 %v574, %v592
    %v601 = vadd.f32 %v416, %v597
    %v602 = vadd.f32 %v601, %v598
    %v603 = vadd.f32 %v602, %v599
    %v604 = vadd.f32 %v603, %v600
    %v605 = vld [vmem:[#allocation3 + $0x30] sm:$0xff]
    %v606 = vld [vmem:[#allocation3 + $0x38] sm:$0xff]
    %v607 = vld [vmem:[#allocation3 + $0x70] sm:$0xff]
    %v608 = vld [vmem:[#allocation3 + $0x78] sm:$0xff]
    %v609 = vld [vmem:[#allocation3 + $0xb0] sm:$0xff]
    %v610 = vld [vmem:[#allocation3 + $0xb8] sm:$0xff]
    %v611 = vld [vmem:[#allocation3 + $0xf0] sm:$0xff]
    %v612 = vld [vmem:[#allocation3 + $0xf8] sm:$0xff]
    %v613 = vld [vmem:[#allocation3 + $0x130] sm:$0xff]
    %v614 = vld [vmem:[#allocation3 + $0x138] sm:$0xff]
    %v625 = vunpack.c.l.b16 %v605
    %v626 = vunpack.c.h.b16 %v605
    %v627 = vunpack.c.l.b16 %v606
    %v628 = vunpack.c.h.b16 %v606
    %v629 = vunpack.c.l.b16 %v607
    %v630 = vunpack.c.h.b16 %v607
    %v631 = vunpack.c.l.b16 %v608
    %v632 = vunpack.c.h.b16 %v608
    %v633 = vunpack.c.l.b16 %v609
    %v634 = vunpack.c.h.b16 %v609
    %v635 = vunpack.c.l.b16 %v610
    %v636 = vunpack.c.h.b16 %v610
    %v637 = vunpack.c.l.b16 %v611
    %v638 = vunpack.c.h.b16 %v611
    %v639 = vunpack.c.l.b16 %v612
    %v640 = vunpack.c.h.b16 %v612
    %v641 = vunpack.c.l.b16 %v613
    %v642 = vunpack.c.h.b16 %v613
    %v643 = vunpack.c.l.b16 %v614
    %v644 = vunpack.c.h.b16 %v614
    %v645 = vpack.c.b16 %v629, %v625
    %v646 = vpack.c.b16 %v630, %v626
    %v647 = vpack.c.b16 %v631, %v627
    %v648 = vpack.c.b16 %v632, %v628
    %v649 = vpack.c.b16 %v637, %v633
    %v650 = vpack.c.b16 %v638, %v634
    %v651 = vpack.c.b16 %v639, %v635
    %v652 = vpack.c.b16 %v640, %v636
    %v653 = vpack.c.b16 %v641, %v641
    %v654 = vpack.c.b16 %v642, %v642
    %v655 = vpack.c.b16 %v643, %v643
    %v656 = vpack.c.b16 %v644, %v644
    %v666 = vsel %vm100, %v653, 0
    %v669 = vsel %vm100, %v654, 0
    %v672 = vsel %vm100, %v655, 0
    %v675 = vsel %vm100, %v656, 0
    %677 = vmatprep.subr.bf16.mxu0 %v646
    %678 = vmatpush1.bf16.msra.mxu0 %v645
    %679 = vmatprep.subr.bf16.mxu0 %v650
    %680 = vmatpush1.bf16.msra.mxu0 %v649
    %681 = vmatprep.subr.bf16.mxu0 %v669
    %682 = vmatpush1.bf16.msra.mxu0 %v666
    %683 = vmatprep.subr.bf16.mxu0 0
    %684 = vmatpush1.bf16.msra.mxu0 0
    %685 = vmatprep.subr.bf16.mxu0 0
    %686 = vmatpush1.bf16.msra.mxu0 0
    %687 = vmatprep.subr.bf16.mxu0 0
    %688 = vmatpush1.bf16.msra.mxu0 0
    %689 = vmatprep.subr.bf16.mxu0 0
    %690 = vmatpush1.bf16.msra.mxu0 0
    %691 = vmatprep.subr.bf16.mxu0 0
    %692 = vmatpush1.bf16.msra.mxu0 0
    %693 = vmatprep.subr.bf16.mxu0 0
    %694 = vmatpush1.bf16.msra.mxu0 0
    %695 = vmatprep.subr.bf16.mxu0 0
    %696 = vmatpush1.bf16.msra.mxu0 0
    %697 = vmatprep.subr.bf16.mxu0 0
    %698 = vmatpush1.bf16.msra.mxu0 0
    %699 = vmatprep.subr.bf16.mxu0 0
    %700 = vmatpush1.bf16.msra.mxu0 0
    %701 = vmatprep.subr.bf16.mxu0 0
    %702 = vmatpush1.bf16.msra.mxu0 0
    %703 = vmatprep.subr.bf16.mxu0 0
    %704 = vmatpush1.bf16.msra.mxu0 0
    %705 = vmatprep.subr.bf16.mxu0 0
    %706 = vmatpush1.bf16.msra.mxu0 0
    %707 = vmatprep.subr.bf16.mxu0 0
    %708 = vmatpush1.bf16.msra.mxu0 0
    %709 = vmatprep.mubr.bf16.mxu0 0
    %710 = vmatmul.mubr.bf16.gmra.mrb[0].mxu0 %v98
    %v711 = vpop.f32.mrb[0].mxu0
    %v712 = vadd.f32 0.0, %v711
    %v713 = vpop.f32.mrb[0].mxu0
    %v714 = vadd.f32 0.0, %v713
    %v715 = vpop.f32.mrb[0].mxu0
    %v716 = vpop.f32.mrb[0].mxu0
    %717 = vdwg.mxu0
    %718 = vmatprep.subr.bf16.mxu0 %v648
    %719 = vmatpush1.bf16.msra.mxu0 %v647
    %720 = vmatprep.subr.bf16.mxu0 %v652
    %721 = vmatpush1.bf16.msra.mxu0 %v651
    %722 = vmatprep.subr.bf16.mxu0 %v675
    %723 = vmatpush1.bf16.msra.mxu0 %v672
    %724 = vmatprep.subr.bf16.mxu0 0
    %725 = vmatpush1.bf16.msra.mxu0 0
    %726 = vmatprep.subr.bf16.mxu0 0
    %727 = vmatpush1.bf16.msra.mxu0 0
    %728 = vmatprep.subr.bf16.mxu0 0
    %729 = vmatpush1.bf16.msra.mxu0 0
    %730 = vmatprep.subr.bf16.mxu0 0
    %731 = vmatpush1.bf16.msra.mxu0 0
    %732 = vmatprep.subr.bf16.mxu0 0
    %733 = vmatpush1.bf16.msra.mxu0 0
    %734 = vmatprep.subr.bf16.mxu0 0
    %735 = vmatpush1.bf16.msra.mxu0 0
    %736 = vmatprep.subr.bf16.mxu0 0
    %737 = vmatpush1.bf16.msra.mxu0 0
    %738 = vmatprep.subr.bf16.mxu0 0
    %739 = vmatpush1.bf16.msra.mxu0 0
    %740 = vmatprep.subr.bf16.mxu0 0
    %741 = vmatpush1.bf16.msra.mxu0 0
    %742 = vmatprep.subr.bf16.mxu0 0
    %743 = vmatpush1.bf16.msra.mxu0 0
    %744 = vmatprep.subr.bf16.mxu0 0
    %745 = vmatpush1.bf16.msra.mxu0 0
    %746 = vmatprep.subr.bf16.mxu0 0
    %747 = vmatpush1.bf16.msra.mxu0 0
    %748 = vmatprep.subr.bf16.mxu0 0
    %749 = vmatpush1.bf16.msra.mxu0 0
    %750 = vmatprep.mubr.bf16.mxu0 0
    %751 = vmatmul.mubr.bf16.gmra.mrb[0].mxu0 %v98
    %v752 = vpop.f32.mrb[0].mxu0
    %v753 = vadd.f32 0.0, %v752
    %v754 = vpop.f32.mrb[0].mxu0
    %v755 = vadd.f32 0.0, %v754
    %v756 = vpop.f32.mrb[0].mxu0
    %v757 = vpop.f32.mrb[0].mxu0
    %758 = vdwg.mxu0
    %v759 = vmax.f32 %v712, 0.0
    %v760 = vmax.f32 %v714, 0.0
    %v761 = vmax.f32 %v753, 0.0
    %v762 = vmax.f32 %v755, 0.0
    %v763 = vld [vmem:[%s2 + $0xc] sm:$0xf]
    %v765 = vlaneseq
    %v766 = vshrl.u32 %v765, 7
    %v767 = vsub.s32 0, %v766
    %v768 = vrot.slane %v763, %v767
    %v769 = vlaneseq
    %v770 = vshrl.u32 %v769, 7
    %v771 = vsub.s32 1, %v770
    %v772 = vrot.slane %v763, %v771
    %v773 = vlaneseq
    %v774 = vshrl.u32 %v773, 7
    %v775 = vsub.s32 2, %v774
    %v776 = vrot.slane %v763, %v775
    %v777 = vlaneseq
    %v778 = vshrl.u32 %v777, 7
    %v779 = vsub.s32 3, %v778
    %v780 = vrot.slane %v763, %v779
    %v785 = vmul.f32 %v759, %v768
    %v786 = vmul.f32 %v760, %v772
    %v787 = vmul.f32 %v761, %v776
    %v788 = vmul.f32 %v762, %v780
    %v789 = vadd.f32 %v604, %v785
    %v790 = vadd.f32 %v789, %v786
    %v791 = vadd.f32 %v790, %v787
    %v792 = vadd.f32 %v791, %v788
    %793 = vadd.xlane.f32.xlu0 %v792
    %v794 = vpop.xlane.xlu0 %793
    %v795 = vld [vmem:[#allocation2] sm:$0x1]
    %v797 = vlaneseq
    %v798 = vshrl.u32 %v797, 7
    %v799 = vsub.s32 0, %v798
    %v800 = vrot.slane %v795, %v799
    %v802 = vadd.f32 %v794, %v800
    %vm803 = vcmask 7168
    %804 = vst.msk [vmem:[%s4] sm:$0xff] %vm803, %v802
    // Predicated region
    $region22: #{linear_net_forward.1} parent=1 // pred_check
      _
    $region23: #{linear_net_forward.1} parent=1 // pred_check_branch
      %806 = sbr.rel (0) target = $region25
    $region24: #{linear_net_forward.1} parent=1 // pred_region
      _
    $region25: #{linear_net_forward.1} parent=1 // pred_fallthru
      _
    // Predicated region
    $region26: #{linear_net_forward.1} parent=1 // pred_check
      _
    $region27: #{linear_net_forward.1} parent=1 // pred_check_branch
      %808 = sbr.rel (0) target = $region29
    $region28: #{linear_net_forward.1} parent=1 // pred_region
      _
    $region29: #{linear_net_forward.1} parent=1 // pred_fallthru
      _
    %809 = vsyncpa [#allocation4], 1

</llo_original>
